<compile_context>
chip_gen: v7x
topology: tpu7x:2x2x1
jax: 0.10.0
libtpu: 0.0.40
codegen_flags: <defaults>
</compile_context>

<pallas_src>
import jax
import jax.numpy as jnp
from jax.experimental import pallas as pl
from jax.experimental.pallas import tpu as pltpu


def _cdiv(a, b):
    return -(-a // b)


def _round_up(x, m):
    return _cdiv(x, m) * m


def _vmem_capacity_bytes():
    try:
        info = pltpu.get_tpu_info()
        cap = getattr(info, "vmem_capacity_bytes", None)
        if cap:
            return int(cap)
    except Exception:
        pass
    return 64 * 1024 * 1024  # conservative (v7x) fallback


# ----------------------------------------------------------------------------
# Fused single-read path: one grid step per channel block, whole (B, Ct, L)
# slab resident in VMEM.  1 read + 1 write of x.
# ----------------------------------------------------------------------------
def _make_fused_kernel(count, eps, ct):
    inv_count = 1.0 / float(count)

    def kernel(w_ref, b_ref, x_ref, o_ref, mean_ref, var_ref):
        x = x_ref[...].astype(jnp.float32)                         # (B, Ct, L)
        s = jnp.sum(jnp.sum(x, axis=2, keepdims=True), axis=0, keepdims=True)
        mean = s * inv_count                                       # (1, Ct, 1)
        d = x - mean
        v = jnp.sum(jnp.sum(d * d, axis=2, keepdims=True), axis=0, keepdims=True)
        var = v * inv_count                                        # centered -> accurate
        inv = jax.lax.rsqrt(var + eps)
        w = jnp.reshape(w_ref[...], (1, ct, 1))
        b = jnp.reshape(b_ref[...], (1, ct, 1))
        scale = inv * w
        shift = b - mean * scale
        o_ref[...] = (x * scale + shift).astype(o_ref.dtype)
        mean_ref[...] = jnp.reshape(mean, (ct, 1))
        var_ref[...] = jnp.reshape(var, (ct, 1))

    return kernel


# ----------------------------------------------------------------------------
# Two-pass fallback, pass 1: per-channel lane-partial sum / sum-of-squares.
# Accumulators are (Ct, Aw) f32 blocks resident across the (b, l) reduction axes.
# ----------------------------------------------------------------------------
def _make_stats_kernel(true_l, lt, n_inner, aw):
    n_chunks = max(1, lt // aw)

    def kernel(x_ref, sum_ref, sumsq_ref):
        b = pl.program_id(2)
        l = pl.program_id(3)

        @pl.when((b == 0) & (l == 0))
        def _():
            sum_ref[...] = jnp.zeros_like(sum_ref)
            sumsq_ref[...] = jnp.zeros_like(sumsq_ref)

        s = pl.program_id(1)
        start = (s * n_inner + l) * lt                     # element offset along L
        x = x_ref[...].astype(jnp.float32)                 # (Ct, Lt)
        col = jax.lax.broadcasted_iota(jnp.int32, x.shape, 1) + start
        x = jnp.where(col < true_l, x, 0.0)                # mask ragged / overshoot lanes

        acc_s = jnp.zeros((x.shape[0], aw), jnp.float32)
        acc_q = jnp.zeros((x.shape[0], aw), jnp.float32)
        for t in range(n_chunks):                          # unrolled, pure VPU adds
            blk = x[:, t * aw:(t + 1) * aw]
            acc_s = acc_s + blk
            acc_q = acc_q + blk * blk
        sum_ref[...] += acc_s
        sumsq_ref[...] += acc_q

    return kernel


# ----------------------------------------------------------------------------
# Two-pass fallback, pass 2: y = x * scale + shift (per-channel fused affine).
# ----------------------------------------------------------------------------
def _bn_norm_kernel(scale_ref, shift_ref, x_ref, o_ref):
    y = x_ref[...].astype(jnp.float32) * scale_ref[...] + shift_ref[...]
    o_ref[...] = y.astype(o_ref.dtype)


def adaptive_bn_forward(x, weight, bias, running_mean, running_var, *,
                        eps=1e-5, momentum=0.1, force_two_pass=False):
    """Training-mode AdaptiveBN forward.

    x: (B, C, L); weight/bias/running_*: (max_nc,) with max_nc >= C.
    Returns (output (B, C, L), new_running_mean, new_running_var).
    """
    B, C, L = x.shape
    assert weight.shape[0] >= C and bias.shape[0] >= C
    out_dtype = x.dtype
    itemsize = jnp.dtype(x.dtype).itemsize
    out_itemsize = jnp.dtype(out_dtype).itemsize
    unit = max(8, 32 // itemsize)            # dtype-aware sublane unit: f32->8, bf16->16, i8->32

    vmem_limit = int(min(_vmem_capacity_bytes() * 0.7, 112 * 1024 * 1024))

    n = B * L
    cnt = float(n)
    w_c = weight[:C].astype(jnp.float32)
    b_c = bias[:C].astype(jnp.float32)

    def fused_block_bytes(ct):
        x_b = B * ct * L * itemsize
        o_b = B * ct * L * out_itemsize
        f32_b = B * ct * L * 4
        return 2 * x_b + 2 * o_b + 3 * f32_b   # double-buffered IO + f32 temporaries

    # ------------------- choose fused-path channel block -------------------
    if C <= unit:
        ct = C
    else:
        c_floor = (C // unit) * unit
        bytes_per_ch = max(1, B * L * itemsize)
        ct = ((1 << 20) // bytes_per_ch) // unit * unit       # ~1 MiB x-block target
        ct = int(min(max(ct, unit), c_floor))
        if _cdiv(C, ct) < 2:                                  # >=2 blocks: megacore + pipelining
            ct = min(max(unit, _round_up(_cdiv(C, 2), unit)), c_floor)
        while ct > unit and fused_block_bytes(ct) > vmem_limit:
            ct -= unit

    use_fused = (not force_two_pass) and fused_block_bytes(ct) <= vmem_limit

    if use_fused:
        # ---------------- fused 1R + 1W path ----------------
        n_cb = _cdiv(C, ct)
        cp = n_cb * ct
        w_p = jnp.zeros((cp, 1), jnp.float32).at[:C, 0].set(w_c)
        b_p = jnp.zeros((cp, 1), jnp.float32).at[:C, 0].set(b_c)

        out, mean_p, var_p = pl.pallas_call(
            _make_fused_kernel(cnt, float(eps), ct),
            out_shape=(jax.ShapeDtypeStruct((B, C, L), out_dtype),
                       jax.ShapeDtypeStruct((cp, 1), jnp.float32),
                       jax.ShapeDtypeStruct((cp, 1), jnp.float32)),
            grid=(n_cb,),
            in_specs=[pl.BlockSpec((ct, 1), lambda c: (c, 0)),
                      pl.BlockSpec((ct, 1), lambda c: (c, 0)),
                      pl.BlockSpec((B, ct, L), lambda c: (0, c, 0))],
            out_specs=(pl.BlockSpec((B, ct, L), lambda c: (0, c, 0)),
                       pl.BlockSpec((ct, 1), lambda c: (c, 0)),
                       pl.BlockSpec((ct, 1), lambda c: (c, 0))),
            compiler_params=pltpu.CompilerParams(
                dimension_semantics=("parallel",),
                vmem_limit_bytes=vmem_limit),
        )(w_p, b_p, x)

        mean = mean_p[:C, 0]
        var = var_p[:C, 0]
    else:
        # ---------------- two-pass fallback (2R + 1W) ----------------
        if C <= unit:
            Ct = C
        else:
            Ct = int(min(max(unit, (C // unit) * unit), 16 * unit))

        TARGET = 2 * 1024 * 1024
        if L < 128:
            Lt = L
        else:
            max_lt = (L // 128) * 128
            want = 128 * max(1, TARGET // max(1, Ct * itemsize * 128))
            Lt = int(max(128, min(want, max_lt, 8192)))
        # keep pass-2 working set (2 in + 2 out blocks + f32 temps) inside the VMEM budget
        while Lt > 128 and Ct * Lt * (2 * itemsize + 2 * out_itemsize + 8) > vmem_limit:
            Lt = max(128, Lt - 128)

        n_cb = _cdiv(C, Ct)
        n_lb = _cdiv(L, Lt)
        n_split = 2 if (n_cb < 2 and n_lb >= 2) else 1   # v7x: expose >=2 parallel units
        n_inner = _cdiv(n_lb, n_split)
        aw = Lt if Lt < 128 else 128
        cp = n_cb * Ct

        x_idx = lambda c, s, b, l: (b, c, jnp.minimum(s * n_inner + l, n_lb - 1))
        acc_idx = lambda c, s, b, l: (c, s)

        sum_p, sumsq_p = pl.pallas_call(
            _make_stats_kernel(L, Lt, n_inner, aw),
            out_shape=(jax.ShapeDtypeStruct((cp, n_split * aw), jnp.float32),
                       jax.ShapeDtypeStruct((cp, n_split * aw), jnp.float32)),
            grid=(n_cb, n_split, B, n_inner),
            in_specs=[pl.BlockSpec((None, Ct, Lt), x_idx)],
            out_specs=(pl.BlockSpec((Ct, aw), acc_idx),
                       pl.BlockSpec((Ct, aw), acc_idx)),
            compiler_params=pltpu.CompilerParams(
                dimension_semantics=("parallel", "parallel", "arbitrary", "arbitrary"),
                vmem_limit_bytes=vmem_limit),
        )(x)

        sum_c = jnp.sum(sum_p, axis=1)[:C]
        sumsq_c = jnp.sum(sumsq_p, axis=1)[:C]
        mean = sum_c / cnt
        var = jnp.maximum(sumsq_c / cnt - mean * mean, 0.0)   # biased variance (E[x^2]-mean^2)

        inv = jax.lax.rsqrt(var + jnp.float32(eps))
        scale_c = inv * w_c
        shift_c = b_c - mean * scale_c
        scale = jnp.zeros((cp, 1), jnp.float32).at[:C, 0].set(scale_c)
        shift = jnp.zeros((cp, 1), jnp.float32).at[:C, 0].set(shift_c)

        out = pl.pallas_call(
            _bn_norm_kernel,
            out_shape=jax.ShapeDtypeStruct((B, C, L), out_dtype),
            grid=(n_cb, B, n_lb),
            in_specs=[pl.BlockSpec((Ct, 1), lambda c, b, l: (c, 0)),
                      pl.BlockSpec((Ct, 1), lambda c, b, l: (c, 0)),
                      pl.BlockSpec((None, Ct, Lt), lambda c, b, l: (b, c, l))],
            out_specs=pl.BlockSpec((None, Ct, Lt), lambda c, b, l: (b, c, l)),
            compiler_params=pltpu.CompilerParams(
                dimension_semantics=("parallel", "parallel", "parallel"),
                vmem_limit_bytes=vmem_limit),
        )(scale, shift, x)

    # ---- running-stat EMA (buffer side effect in PyTorch); unbiased variance ----
    unbiased = var * (cnt / max(cnt - 1.0, 1.0))
    new_rm = running_mean.at[:C].set(
        ((1.0 - momentum) * running_mean[:C].astype(jnp.float32)
         + momentum * mean).astype(running_mean.dtype))
    new_rv = running_var.at[:C].set(
        ((1.0 - momentum) * running_var[:C].astype(jnp.float32)
         + momentum * unbiased).astype(running_var.dtype))
    # TODO(synk): num_batches_tracked counter increment (and momentum=None cumulative
    # averaging) is an integer buffer side effect with no effect on the output; not modelled.

    return out, new_rm, new_rv


# ------------------------------- self-test -------------------------------
def _run_case(key, batch, nc, embed_dim, max_nc, force_two_pass, atol, rtol):
    eps, momentum = 1e-5, 0.1
    x = jax.random.normal(key, (batch, nc, embed_dim), dtype=jnp.float32) + 0.25
    weight = 1.0 + 0.1 * jnp.arange(max_nc, dtype=jnp.float32)
    bias = 0.05 * jnp.arange(max_nc, dtype=jnp.float32)
    running_mean = jnp.zeros((max_nc,), jnp.float32)
    running_var = jnp.ones((max_nc,), jnp.float32)

    out, new_rm, new_rv = adaptive_bn_forward(
        x, weight, bias, running_mean, running_var,
        eps=eps, momentum=momentum, force_two_pass=force_two_pass)
    out = jax.block_until_ready(out)

    # reference (PyTorch F.batch_norm training semantics)
    x32 = x.astype(jnp.float32)
    mean = jnp.mean(x32, axis=(0, 2))
    var = jnp.mean((x32 - mean[None, :, None]) ** 2, axis=(0, 2))
    ref = ((x32 - mean[None, :, None]) / jnp.sqrt(var[None, :, None] + eps)
           * weight[:nc][None, :, None] + bias[:nc][None, :, None]).astype(x.dtype)
    assert out.shape == x.shape
    err = float(jnp.max(jnp.abs(out - ref)))
    assert jnp.allclose(out, ref, atol=atol, rtol=rtol), f"output max abs err = {err}"

    n = batch * embed_dim
    ubv = var * (n / max(n - 1, 1))
    exp_rm = running_mean.at[:nc].set(0.9 * running_mean[:nc] + 0.1 * mean)
    exp_rv = running_var.at[:nc].set(0.9 * running_var[:nc] + 0.1 * ubv)
    assert jnp.allclose(new_rm, exp_rm, atol=max(atol, 1e-5), rtol=max(rtol, 1e-5))
    assert jnp.allclose(new_rv, exp_rv, atol=max(atol, 1e-5), rtol=max(rtol, 1e-5))


if __name__ == "__main__":
    key = jax.random.PRNGKey(0)

    # 1) fused 1R+1W path (auto-selected): small aligned-ish problem, full-dim blocks.
    _run_case(jax.random.fold_in(key, 1), batch=2, nc=4, embed_dim=32, max_nc=8,
              force_two_pass=False, atol=2e-5, rtol=2e-5)

    # 2) two-pass fallback, fully aligned shapes.
    _run_case(jax.random.fold_in(key, 2), batch=2, nc=8, embed_dim=256, max_nc=8,
              force_two_pass=True, atol=1.5e-4, rtol=1.5e-4)

    # 3) two-pass fallback, ragged L (no padding; in-kernel masking + parallel L-split).
    _run_case(jax.random.fold_in(key, 3), batch=3, nc=5, embed_dim=300, max_nc=6,
              force_two_pass=True, atol=1.5e-4, rtol=1.5e-4)

    print("KERNEL_OK")
</pallas_src>

<mosaic_0001>
module attributes {stable_mosaic.version = 11 : i64} {
  func.func @kernel(%arg0: i32, %arg1: memref<4x1xf32, #tpu.memory_space<vmem>>, %arg2: memref<4x1xf32, #tpu.memory_space<vmem>>, %arg3: memref<2x4x32xf32, #tpu.memory_space<vmem>>, %arg4: memref<2x4x32xf32, #tpu.memory_space<vmem>>, %arg5: memref<4x1xf32, #tpu.memory_space<vmem>>, %arg6: memref<4x1xf32, #tpu.memory_space<vmem>>) attributes {dimension_semantics = [#tpu.dimension_semantics<parallel>], iteration_bounds = array<i64: 1>, scalar_prefetch = 0 : i64, scratch_operands = 0 : i64, tpu.core_type = #tpu.core_type<tc>, window_params = [{transform_indices = @transform_0, window_bounds = array<i64: 4, 1>}, {transform_indices = @transform_1, window_bounds = array<i64: 4, 1>}, {transform_indices = @transform_2, window_bounds = array<i64: 2, 4, 32>}, {transform_indices = @transform_3, window_bounds = array<i64: 2, 4, 32>}, {transform_indices = @transform_4, window_bounds = array<i64: 4, 1>}, {transform_indices = @transform_5, window_bounds = array<i64: 4, 1>}]} {
    %c0 = arith.constant 0 : index
    %c0_0 = arith.constant 0 : index
    %c0_1 = arith.constant 0 : index
    %0 = vector.load %arg3[%c0, %c0_0, %c0_1] : memref<2x4x32xf32, #tpu.memory_space<vmem>>, vector<2x4x32xf32>
    %cst = arith.constant dense<0.000000e+00> : vector<2x4xf32>
    %1 = vector.multi_reduction <add>, %0, %cst [2] : vector<2x4x32xf32> to vector<2x4xf32>
    %2 = vector.shape_cast %1 : vector<2x4xf32> to vector<2x4x1xf32>
    %cst_2 = arith.constant dense<0.000000e+00> : vector<4x1xf32>
    %3 = vector.multi_reduction <add>, %2, %cst_2 [0] : vector<2x4x1xf32> to vector<4x1xf32>
    %4 = vector.shape_cast %3 : vector<4x1xf32> to vector<1x4x1xf32>
    %cst_3 = arith.constant 1.562500e-02 : f32
    %5 = vector.broadcast %cst_3 : f32 to vector<1x4x1xf32>
    %6 = arith.mulf %4, %5 : vector<1x4x1xf32>
    %7 = vector.broadcast %6 : vector<1x4x1xf32> to vector<2x4x32xf32>
    %8 = arith.subf %0, %7 : vector<2x4x32xf32>
    %9 = arith.mulf %8, %8 : vector<2x4x32xf32>
    %cst_4 = arith.constant dense<0.000000e+00> : vector<2x4xf32>
    %10 = vector.multi_reduction <add>, %9, %cst_4 [2] : vector<2x4x32xf32> to vector<2x4xf32>
    %11 = vector.shape_cast %10 : vector<2x4xf32> to vector<2x4x1xf32>
    %cst_5 = arith.constant dense<0.000000e+00> : vector<4x1xf32>
    %12 = vector.multi_reduction <add>, %11, %cst_5 [0] : vector<2x4x1xf32> to vector<4x1xf32>
    %13 = vector.shape_cast %12 : vector<4x1xf32> to vector<1x4x1xf32>
    %cst_6 = arith.constant 1.562500e-02 : f32
    %14 = vector.broadcast %cst_6 : f32 to vector<1x4x1xf32>
    %15 = arith.mulf %13, %14 : vector<1x4x1xf32>
    %cst_7 = arith.constant 9.99999974E-6 : f32
    %16 = vector.broadcast %cst_7 : f32 to vector<1x4x1xf32>
    %17 = arith.addf %15, %16 : vector<1x4x1xf32>
    %18 = math.rsqrt %17 : vector<1x4x1xf32>
    %c0_8 = arith.constant 0 : index
    %c0_9 = arith.constant 0 : index
    %19 = vector.load %arg1[%c0_8, %c0_9] : memref<4x1xf32, #tpu.memory_space<vmem>>, vector<4x1xf32>
    %20 = vector.shape_cast %19 : vector<4x1xf32> to vector<1x4x1xf32>
    %c0_10 = arith.constant 0 : index
    %c0_11 = arith.constant 0 : index
    %21 = vector.load %arg2[%c0_10, %c0_11] : memref<4x1xf32, #tpu.memory_space<vmem>>, vector<4x1xf32>
    %22 = vector.shape_cast %21 : vector<4x1xf32> to vector<1x4x1xf32>
    %23 = arith.mulf %18, %20 : vector<1x4x1xf32>
    %24 = arith.mulf %6, %23 : vector<1x4x1xf32>
    %25 = arith.subf %22, %24 : vector<1x4x1xf32>
    %26 = vector.broadcast %23 : vector<1x4x1xf32> to vector<2x4x32xf32>
    %27 = arith.mulf %0, %26 : vector<2x4x32xf32>
    %28 = vector.broadcast %25 : vector<1x4x1xf32> to vector<2x4x32xf32>
    %29 = arith.addf %27, %28 : vector<2x4x32xf32>
    %c0_12 = arith.constant 0 : index
    %c0_13 = arith.constant 0 : index
    %c0_14 = arith.constant 0 : index
    %30 = vector.load %arg4[%c0_12, %c0_13, %c0_14] : memref<2x4x32xf32, #tpu.memory_space<vmem>>, vector<2x4x32xf32>
    tpu.vector_store %arg4[%c0_12, %c0_13, %c0_14], %29 {strides = array<i32>} : memref<2x4x32xf32, #tpu.memory_space<vmem>>, vector<2x4x32xf32>,
    %31 = vector.shape_cast %6 : vector<1x4x1xf32> to vector<4x1xf32>
    %c0_15 = arith.constant 0 : index
    %c0_16 = arith.constant 0 : index
    %32 = vector.load %arg5[%c0_15, %c0_16] : memref<4x1xf32, #tpu.memory_space<vmem>>, vector<4x1xf32>
    tpu.vector_store %arg5[%c0_15, %c0_16], %31 {strides = array<i32>} : memref<4x1xf32, #tpu.memory_space<vmem>>, vector<4x1xf32>,
    %33 = vector.shape_cast %15 : vector<1x4x1xf32> to vector<4x1xf32>
    %c0_17 = arith.constant 0 : index
    %c0_18 = arith.constant 0 : index
    %34 = vector.load %arg6[%c0_17, %c0_18] : memref<4x1xf32, #tpu.memory_space<vmem>>, vector<4x1xf32>
    tpu.vector_store %arg6[%c0_17, %c0_18], %33 {strides = array<i32>} : memref<4x1xf32, #tpu.memory_space<vmem>>, vector<4x1xf32>,
    return
  }
  func.func @transform_0(%arg0: i32) -> (i32, i32) {
    %c0_i32 = arith.constant 0 : i32
    %c0_i32_0 = arith.constant 0 : i32
    return %arg0, %c0_i32 : i32, i32
  }
  func.func @transform_1(%arg0: i32) -> (i32, i32) {
    %c0_i32 = arith.constant 0 : i32
    %c0_i32_0 = arith.constant 0 : i32
    return %arg0, %c0_i32 : i32, i32
  }
  func.func @transform_2(%arg0: i32) -> (i32, i32, i32) {
    %c0_i32 = arith.constant 0 : i32
    %c0_i32_0 = arith.constant 0 : i32
    %c0_i32_1 = arith.constant 0 : i32
    return %c0_i32, %arg0, %c0_i32_0 : i32, i32, i32
  }
  func.func @transform_3(%arg0: i32) -> (i32, i32, i32) {
    %c0_i32 = arith.constant 0 : i32
    %c0_i32_0 = arith.constant 0 : i32
    %c0_i32_1 = arith.constant 0 : i32
    return %c0_i32, %arg0, %c0_i32_0 : i32, i32, i32
  }
  func.func @transform_4(%arg0: i32) -> (i32, i32) {
    %c0_i32 = arith.constant 0 : i32
    %c0_i32_0 = arith.constant 0 : i32
    return %arg0, %c0_i32 : i32, i32
  }
  func.func @transform_5(%arg0: i32) -> (i32, i32) {
    %c0_i32 = arith.constant 0 : i32
    %c0_i32_0 = arith.constant 0 : i32
    return %arg0, %c0_i32 : i32, i32
  }
}

</mosaic_0001>

<llo_original>
// kernel: tpu_custom_call.1
$region0: #{tpu_custom_call.1}
  #allocation0 [shape = 'u32[]', space=smem, size = 0x4, offset = 0x4, fixed_abs, tag = 'smem constant byte address 0x4 - core index']
  #allocation1 [shape = 'u32[144,128]{1,0:T(1,128)}', space=vmem, size = 0x12000, scoped, tag = 'internal scratch']
  %s0 = inlined_call_operand.vmem [shape: f32[4,1], index: 0, kind: input, shape index: {}]
  %s1 = inlined_call_operand.vmem [shape: f32[4,1], index: 1, kind: input, shape index: {}]
  %s2 = inlined_call_operand.vmem [shape: f32[2,4,32], index: 2, kind: input, shape index: {}]
  %s3 = inlined_call_operand.hbm [shape: f32[2,4,32], index: 3, kind: output, shape index: {0}]
  %s4 = inlined_call_operand.vmem [shape: f32[4,1], index: 4, kind: output, shape index: {1}]
  %s5 = inlined_call_operand.vmem [shape: f32[4,1], index: 5, kind: output, shape index: {2}]
  %6 = xla_tuple %s3, %s4, %s5
  %s7 = sld [smem:[#allocation0]]
  $region38: #{tpu_custom_call.1} parent=0
    _
  %s9 = ssub.s32 1, %s7
  %s10 = scalar_select 0, %s9, %s7
  $region1: #{tpu_custom_call.1} parent=0
    #allocation2 [shape = 'u8[4096]{0}', space=vmem, size = 0x1000, scoped, tag = 'output window, operand 0, single buffered']
    #allocation3 [shape = 's32[1]{0}', space=sflag, size = 0x4, scoped, tag = 'scoped memory for tpu_custom_call.1']
    %11 = vsyncpa [#allocation3], 0
    // Predicated region
    $region2: #{tpu_custom_call.1} parent=1 // pred_check
      _
    $region3: #{tpu_custom_call.1} parent=1 // pred_check_branch
      %13 = sbr.rel (0) target = $region5
    $region4: #{tpu_custom_call.1} parent=1 // pred_region
      _
    $region5: #{tpu_custom_call.1} parent=1 // pred_fallthru
      _
    // Predicated region
    $region6: #{tpu_custom_call.1} parent=1 // pred_check
      _
    $region7: #{tpu_custom_call.1} parent=1 // pred_check_branch
      %15 = sbr.rel (0) target = $region9
    $region8: #{tpu_custom_call.1} parent=1 // pred_region
      _
    $region9: #{tpu_custom_call.1} parent=1 // pred_fallthru
      _
    // Predicated region
    $region10: #{tpu_custom_call.1} parent=1 // pred_check
      _
    $region11: #{tpu_custom_call.1} parent=1 // pred_check_branch
      %17 = sbr.rel (0) target = $region13
    $region12: #{tpu_custom_call.1} parent=1 // pred_region
      _
    $region13: #{tpu_custom_call.1} parent=1 // pred_fallthru
      _
    %v18 = vld [vmem:[%s2] sm:$0xf]
    %v19 = vld [vmem:[%s2 + $0x4] sm:$0xf]
    %vm20 = vcmask 257024
    %v21 = vsel %vm20, %v18, 0.0
    %22 = vadd.xlane.f32.xlu0 %v21
    %v23 = vpop.xlane.xlu0 %22
    %v24 = vsel %vm20, %v19, 0.0
    %25 = vadd.xlane.f32.xlu0 %v24
    %v26 = vpop.xlane.xlu0 %25
    %vm27 = vcmask 1043456
    %v28 = vsel %vm27, %v23, 0.0
    %v29 = vsel %vm27, %v26, 0.0
    %v30 = vadd.f32 %v28, %v29
    %v31 = vmul.f32 %v30, 0.015625
    %v32 = vsub.f32 %v18, %v31
    %v33 = vsub.f32 %v19, %v31
    %v34 = vmul.f32 %v32, %v32
    %v35 = vmul.f32 %v33, %v33
    %v36 = vsel %vm20, %v34, 0.0
    %37 = vadd.xlane.f32.xlu0 %v36
    %v38 = vpop.xlane.xlu0 %37
    %v39 = vsel %vm20, %v35, 0.0
    %40 = vadd.xlane.f32.xlu0 %v39
    %v41 = vpop.xlane.xlu0 %40
    %v42 = vsel %vm27, %v38, 0.0
    %v43 = vsel %vm27, %v41, 0.0
    %v44 = vadd.f32 %v42, %v43
    %v45 = vmul.f32 %v44, 0.015625
    %v46 = vadd.f32 %v45, 1e-05
    %v47 = vrsqrt.pop %v46
    %v48 = vld [vmem:[%s0] sm:$0xf]
    %v49 = vld [vmem:[%s1] sm:$0xf]
    %v50 = vmul.f32 %v47, %v48
    %v51 = vmul.f32 %v31, %v50
    %v52 = vsub.f32 %v49, %v51
    %54 = vset.pattern.permute.xlu0 0
    %55 = vperm.xlu0 %54, %v50
    %v56 = vpop.permute.xlu0 %55
    %v58 = vmul.f32 %v18, %v56
    %v59 = vmul.f32 %v19, %v56
    %61 = vset.pattern.permute.xlu0 0
    %62 = vperm.xlu0 %61, %v52
    %v63 = vpop.permute.xlu0 %62
    %v65 = vadd.f32 %v58, %v63
    %v66 = vadd.f32 %v59, %v63
    %67 = vst.msk [vmem:[#allocation2] sm:$0xf] %vm20, %v65
    %68 = vst.msk [vmem:[#allocation2 + $0x4] sm:$0xf] %vm20, %v66
    %vm69 = vcmask 3072
    %70 = vst.msk [vmem:[%s4] sm:$0xf] %vm69, %v31
    %71 = vst.msk [vmem:[%s5] sm:$0xf] %vm69, %v45
    // Predicated region
    $region14: #{tpu_custom_call.1} parent=1 // pred_check
      _
    $region15: #{tpu_custom_call.1} parent=1 // pred_check_branch
      %73 = sbr.rel (0) target = $region17
    $region16: #{tpu_custom_call.1} parent=1 // pred_region
      %s75 = ssub.s32 128, 128
      %76 = vsyncadd [#allocation3], %s75
      %s77 = sshll.u32 [#allocation2], 4
      %s78 = int_to_ptr.vmem [resolvable:$true] %s77
      %83 = dma.vmem_to_hbm [thread:$0]  %s78, 128, %s3, [#allocation3], 64, 64, 4
    $region17: #{tpu_custom_call.1} parent=1 // pred_fallthru
      _
    // Predicated region
    $region18: #{tpu_custom_call.1} parent=1 // pred_check
      _
    $region19: #{tpu_custom_call.1} parent=1 // pred_check_branch
      %85 = sbr.rel (0) target = $region21
    $region20: #{tpu_custom_call.1} parent=1 // pred_region
      _
    $region21: #{tpu_custom_call.1} parent=1 // pred_fallthru
      _
    // Predicated region
    $region22: #{tpu_custom_call.1} parent=1 // pred_check
      _
    $region23: #{tpu_custom_call.1} parent=1 // pred_check_branch
      %87 = sbr.rel (0) target = $region25
    $region24: #{tpu_custom_call.1} parent=1 // pred_region
      _
    $region25: #{tpu_custom_call.1} parent=1 // pred_fallthru
      _
    // Predicated region
    $region26: #{tpu_custom_call.1} parent=1 // pred_check
      _
    $region27: #{tpu_custom_call.1} parent=1 // pred_check_branch
      %89 = sbr.rel (0) target = $region29
    $region28: #{tpu_custom_call.1} parent=1 // pred_region
      %90 = dma.done [#allocation3], 128
    $region29: #{tpu_custom_call.1} parent=1 // pred_fallthru
      _
    // Predicated region
    $region30: #{tpu_custom_call.1} parent=1 // pred_check
      _
    $region31: #{tpu_custom_call.1} parent=1 // pred_check_branch
      %92 = sbr.rel (0) target = $region33
    $region32: #{tpu_custom_call.1} parent=1 // pred_region
      _
    $region33: #{tpu_custom_call.1} parent=1 // pred_fallthru
      _
    // Predicated region
    $region34: #{tpu_custom_call.1} parent=1 // pred_check
      _
    $region35: #{tpu_custom_call.1} parent=1 // pred_check_branch
      %94 = sbr.rel (0) target = $region37
    $region36: #{tpu_custom_call.1} parent=1 // pred_region
      _
    $region37: #{tpu_custom_call.1} parent=1 // pred_fallthru
      _
    %95 = vsyncpa [#allocation3], 1

</llo_original>
